<compile_context>
chip_gen: v7x
topology: tpu7x:2x2x1
jax: 0.10.0
libtpu: 0.0.40
codegen_flags: <defaults>
</compile_context>

<pallas_src>
import math

import jax
import jax.numpy as jnp
from jax import lax
from jax.experimental import pallas as pl
from jax.experimental.pallas import tpu as pltpu

_INV_SQRT2 = 1.0 / math.sqrt(2.0)


def _gelu_erf(x):
    # Exact erf GELU, identical to the PyTorch reference:
    #   x * 0.5 * (1 + erf(x / sqrt(2)))
    return x * 0.5 * (1.0 + lax.erf(x * _INV_SQRT2))


# ----------------------------- kernels --------------------------------------

def _kernel_fullk(x_ref, w_ref, b_ref, o_ref):
    """Full-K schedule: one MXU contraction over the whole hidden dim.

    x_ref: (tm, H)   compute dtype
    w_ref: (H, tn)   compute dtype, k-major RHS (no in-kernel transpose)
    b_ref: (1, tn)   f32
    o_ref: (tm, tn)  output dtype
    """
    acc = jnp.dot(x_ref[...], w_ref[...], preferred_element_type=jnp.float32)
    o_ref[...] = _gelu_erf(acc + b_ref[...]).astype(o_ref.dtype)


def _kernel_kblocked(x_ref, w_ref, b_ref, o_ref, acc_ref):
    """Fallback for hidden dims whose full-K weight slab does not fit VMEM.

    Grid = (N, M, K) with K innermost; f32 VMEM accumulator; fused epilogue.
    """
    k = pl.program_id(2)

    @pl.when(k == 0)
    def _():
        acc_ref[...] = jnp.zeros_like(acc_ref)

    acc_ref[...] += jnp.dot(x_ref[...], w_ref[...],
                            preferred_element_type=jnp.float32)

    @pl.when(k == pl.num_programs(2) - 1)
    def _():
        o_ref[...] = _gelu_erf(acc_ref[...] + b_ref[...]).astype(o_ref.dtype)


# ----------------------------- wrapper ---------------------------------------

def _round_up(x, m):
    return ((x + m - 1) // m) * m


def _pick_tile(dim, candidates):
    """Largest candidate that evenly divides `dim`, else the full dim."""
    for c in candidates:
        if c <= dim and dim % c == 0:
            return c
    return dim


def _vmem_capacity_bytes():
    # Per-generation VMEM (v5e/v6e: 128 MiB; v7x: 64 MiB per TensorCore).
    try:
        return int(pltpu.get_tpu_info().vmem_capacity_bytes)
    except Exception:
        return 64 * 1024 * 1024  # conservative fallback


def bert_intermediate(hidden_states, weight, bias, *,
                      use_bf16_mxu=True, tm=None, tn=None, tk=None):
    """BertIntermediate forward: erf-GELU(hidden_states @ weight.T + bias).

    hidden_states: [B, S, H]; weight: [I, H] (PyTorch nn.Linear layout);
    bias: [I].
    use_bf16_mxu=True runs the MXU on bf16 operands with f32 accumulation
    (2-4x throughput, ~1e-2 relative deviation); set False for f32 parity
    with the PyTorch module.
    """
    B, S, H = hidden_states.shape
    I, H2 = weight.shape
    assert H2 == H and bias.shape == (I,)
    M = B * S
    out_dtype = hidden_states.dtype

    compute_dtype = jnp.bfloat16 if use_bf16_mxu else hidden_states.dtype
    in_item = jnp.dtype(compute_dtype).itemsize
    out_item = jnp.dtype(out_dtype).itemsize
    min_sublane = 16 if compute_dtype == jnp.bfloat16 else 8

    # One-time layout/dtype prep (in a real model: done at param-load time).
    x = hidden_states.reshape(M, H).astype(compute_dtype)
    w = weight.T.astype(compute_dtype)               # [H, I], k-major RHS
    b2 = bias.reshape(1, I).astype(jnp.float32)

    vmem_cap = _vmem_capacity_bytes()
    budget = int(0.7 * vmem_cap)                      # headroom for Mosaic scratch

    # ---- M tile: pad M up rather than shrinking tm for awkward B*S ----------
    if tm is None:
        if M >= 512:
            m_align = 256
        elif M >= 128:
            m_align = 128
        else:
            m_align = min_sublane
        M_pad = _round_up(M, m_align)
        tm = _pick_tile(M_pad, (512, 256, 128)) if M_pad >= 128 else M_pad
    else:
        M_pad = _round_up(M, tm)
    if M_pad != M:
        x = jnp.pad(x, ((0, M_pad - M), (0, 0)))

    # ---- N tile candidates (prefer multiples of 256: v6e/v7x MXU is 2x256x256)
    tn_opts = [c for c in (2048, 1024, 512, 256, 128) if c <= I and I % c == 0]
    if not tn_opts:
        tn_opts = [I]

    def fullk_bytes(tn_):
        # Double-buffered x / w / out tiles + bias.
        return (2 * (tm * H + H * tn_) * in_item
                + 2 * tm * tn_ * out_item
                + 2 * tn_ * 4)

    use_fullk = tk is None or tk == H
    if use_fullk:
        if tn is None:
            tn = next((c for c in tn_opts if fullk_bytes(c) <= budget), None)
            if tn is None:
                use_fullk = False          # full-K weight slab does not fit VMEM
        else:
            assert I % tn == 0

    if use_fullk:
        needed = fullk_bytes(tn)
        # N outermost -> the (H, tn) weight slab keeps the same block index
        # across the whole M sweep and is fetched from HBM exactly once.
        grid = (I // tn, M_pad // tm)
        kernel = _kernel_fullk
        in_specs = [
            pl.BlockSpec((tm, H), lambda j, i: (i, 0)),   # activations
            pl.BlockSpec((H, tn), lambda j, i: (0, j)),   # weight slab (resident)
            pl.BlockSpec((1, tn), lambda j, i: (0, j)),   # bias
        ]
        out_spec = pl.BlockSpec((tm, tn), lambda j, i: (i, j))
        scratch = []
        dim_sem = ("parallel", "parallel")
    else:
        # K-blocked fallback: f32 accumulator, K innermost, fused epilogue.
        if tk is None or tk == H:
            tk = _pick_tile(H, (1024, 512, 256, 128))
        assert H % tk == 0
        if tn is None:
            tn = tn_opts[-1]
        assert I % tn == 0
        needed = (2 * (tm * tk + tk * tn) * in_item
                  + 2 * tm * tn * out_item + tm * tn * 4 + 2 * tn * 4)
        grid = (I // tn, M_pad // tm, H // tk)
        kernel = _kernel_kblocked
        in_specs = [
            pl.BlockSpec((tm, tk), lambda j, i, k: (i, k)),   # activations
            pl.BlockSpec((tk, tn), lambda j, i, k: (k, j)),   # weight
            pl.BlockSpec((1, tn), lambda j, i, k: (0, j)),    # bias
        ]
        out_spec = pl.BlockSpec((tm, tn), lambda j, i, k: (i, j))
        scratch = [pltpu.VMEM((tm, tn), jnp.float32)]
        dim_sem = ("parallel", "parallel", "arbitrary")

    vmem_limit = min(int(0.85 * vmem_cap),
                     max(32 * 1024 * 1024, needed + (8 << 20)))

    cost = pl.CostEstimate(
        flops=2 * M_pad * I * H,
        transcendentals=M_pad * I,                     # erf in the epilogue
        bytes_accessed=(M_pad * H + H * I) * in_item
                       + I * 4 + M_pad * I * out_item,
    )

    out = pl.pallas_call(
        kernel,
        out_shape=jax.ShapeDtypeStruct((M_pad, I), out_dtype),
        grid_spec=pltpu.PrefetchScalarGridSpec(
            num_scalar_prefetch=0,
            grid=grid,
            in_specs=in_specs,
            out_specs=out_spec,
            scratch_shapes=scratch,
        ),
        compiler_params=pltpu.CompilerParams(
            dimension_semantics=dim_sem,
            vmem_limit_bytes=vmem_limit,
        ),
        cost_estimate=cost,
    )(x, w, b2)

    return out[:M].reshape(B, S, I)


# ----------------------------- reference & test ------------------------------

def _reference(hidden_states, weight, bias):
    h = jnp.einsum("bsh,ih->bsi",
                   hidden_states.astype(jnp.float32),
                   weight.astype(jnp.float32),
                   precision=lax.Precision.HIGHEST) + bias.astype(jnp.float32)
    return _gelu_erf(h)


if __name__ == "__main__":
    k1, k2, k3, k4, k5, k6 = jax.random.split(jax.random.PRNGKey(0), 6)

    # Small config consistent with the module: hidden=32, intermediate=128.
    B, S, H, I = 2, 8, 32, 128
    hidden_states = jax.random.normal(k1, (B, S, H), dtype=jnp.float32)
    weight = jax.random.normal(k2, (I, H), dtype=jnp.float32) * (1.0 / math.sqrt(H))
    bias = jax.random.normal(k3, (I,), dtype=jnp.float32) * 0.02
    ref = _reference(hidden_states, weight, bias)

    # f32 operand path (PyTorch-parity mode).  Tolerance covers the backend's
    # default f32-matmul pass count.
    out = jax.block_until_ready(
        bert_intermediate(hidden_states, weight, bias, use_bf16_mxu=False))
    assert out.shape == (B, S, I)
    assert jnp.allclose(out, ref, atol=1e-2, rtol=1e-2)

    # Fast bf16-MXU path (f32 accumulation) -> bf16-level tolerance.
    out_bf = jax.block_until_ready(
        bert_intermediate(hidden_states, weight, bias, use_bf16_mxu=True))
    assert jnp.allclose(out_bf, ref, atol=2e-2, rtol=2e-2)

    # Multi-tile full-K grid (N outermost, weight-slab resident) + M padding.
    B2, S2, H2, I2 = 2, 100, 256, 512        # M=200 -> padded to 256
    hs2 = jax.random.normal(k4, (B2, S2, H2), dtype=jnp.float32)
    w2 = jax.random.normal(k5, (I2, H2), dtype=jnp.float32) * (1.0 / math.sqrt(H2))
    b2v = jax.random.normal(k6, (I2,), dtype=jnp.float32) * 0.02
    ref2 = _reference(hs2, w2, b2v)
    out2 = jax.block_until_ready(
        bert_intermediate(hs2, w2, b2v, use_bf16_mxu=False, tm=128, tn=256))
    assert jnp.allclose(out2, ref2, atol=1e-2, rtol=1e-2)

    # Forced K-blocked fallback path (f32 VMEM accumulator, K innermost).
    out3 = jax.block_until_ready(
        bert_intermediate(hs2, w2, b2v, use_bf16_mxu=False, tm=128, tn=256, tk=128))
    assert jnp.allclose(out3, ref2, atol=1e-2, rtol=1e-2)

    print("KERNEL_OK")
</pallas_src>

<mosaic_0001>
module attributes {stable_mosaic.version = 11 : i64} {
  func.func @_kernel_fullk(%arg0: i32, %arg1: i32, %arg2: memref<16x32xf32, #tpu.memory_space<vmem>>, %arg3: memref<32x128xf32, #tpu.memory_space<vmem>>, %arg4: memref<1x128xf32, #tpu.memory_space<vmem>>, %arg5: memref<16x128xf32, #tpu.memory_space<vmem>>) attributes {dimension_semantics = [#tpu.dimension_semantics<parallel>, #tpu.dimension_semantics<parallel>], iteration_bounds = array<i64: 1, 1>, scalar_prefetch = 0 : i64, scratch_operands = 0 : i64, tpu.core_type = #tpu.core_type<tc>, window_params = [{transform_indices = @transform_0, window_bounds = array<i64: 16, 32>}, {transform_indices = @transform_1, window_bounds = array<i64: 32, 128>}, {transform_indices = @transform_2, window_bounds = array<i64: 1, 128>}, {transform_indices = @transform_3, window_bounds = array<i64: 16, 128>}]} {
    %c0 = arith.constant 0 : index
    %c0_0 = arith.constant 0 : index
    %0 = vector.load %arg2[%c0, %c0_0] : memref<16x32xf32, #tpu.memory_space<vmem>>, vector<16x32xf32>
    %c0_1 = arith.constant 0 : index
    %c0_2 = arith.constant 0 : index
    %1 = vector.load %arg3[%c0_1, %c0_2] : memref<32x128xf32, #tpu.memory_space<vmem>>, vector<32x128xf32>
    %cst = arith.constant dense<0.000000e+00> : vector<16x128xf32>
    %2 = tpu.matmul %0, %1, %cst {dimension_numbers = #tpu.dot_dimension_numbers<[1], [0], [0], [1], [0, 0, 1, 1], [], []>} : vector<16x32xf32>, vector<32x128xf32>, vector<16x128xf32> -> vector<16x128xf32>
    %c0_3 = arith.constant 0 : index
    %c0_4 = arith.constant 0 : index
    %3 = vector.load %arg4[%c0_3, %c0_4] : memref<1x128xf32, #tpu.memory_space<vmem>>, vector<1x128xf32>
    %4 = vector.broadcast %3 : vector<1x128xf32> to vector<16x128xf32>
    %5 = arith.addf %2, %4 : vector<16x128xf32>
    %cst_5 = arith.constant 5.000000e-01 : f32
    %6 = vector.broadcast %cst_5 : f32 to vector<16x128xf32>
    %7 = arith.mulf %5, %6 : vector<16x128xf32>
    %cst_6 = arith.constant 0.707106769 : f32
    %8 = vector.broadcast %cst_6 : f32 to vector<16x128xf32>
    %9 = arith.mulf %5, %8 : vector<16x128xf32>
    %10 = math.erf %9 : vector<16x128xf32>
    %cst_7 = arith.constant 1.000000e+00 : f32
    %11 = vector.broadcast %cst_7 : f32 to vector<16x128xf32>
    %12 = arith.addf %11, %10 : vector<16x128xf32>
    %13 = arith.mulf %7, %12 : vector<16x128xf32>
    %c0_8 = arith.constant 0 : index
    %c0_9 = arith.constant 0 : index
    %14 = vector.load %arg5[%c0_8, %c0_9] : memref<16x128xf32, #tpu.memory_space<vmem>>, vector<16x128xf32>
    tpu.vector_store %arg5[%c0_8, %c0_9], %13 {strides = array<i32>} : memref<16x128xf32, #tpu.memory_space<vmem>>, vector<16x128xf32>,
    return
  }
  func.func @transform_0(%arg0: i32, %arg1: i32) -> (i32, i32) {
    %c0_i32 = arith.constant 0 : i32
    %c0_i32_0 = arith.constant 0 : i32
    return %arg1, %c0_i32 : i32, i32
  }
  func.func @transform_1(%arg0: i32, %arg1: i32) -> (i32, i32) {
    %c0_i32 = arith.constant 0 : i32
    %c0_i32_0 = arith.constant 0 : i32
    return %c0_i32, %arg0 : i32, i32
  }
  func.func @transform_2(%arg0: i32, %arg1: i32) -> (i32, i32) {
    %c0_i32 = arith.constant 0 : i32
    %c0_i32_0 = arith.constant 0 : i32
    return %c0_i32, %arg0 : i32, i32
  }
  func.func @transform_3(%arg0: i32, %arg1: i32) -> (i32, i32) {
    %c0_i32 = arith.constant 0 : i32
    return %arg1, %arg0 : i32, i32
  }
}

</mosaic_0001>

<llo_original>
// kernel: tpu_custom_call.1
$region0: #{tpu_custom_call.1}
  #allocation0 [shape = 'u32[]', space=smem, size = 0x4, offset = 0x4, fixed_abs, tag = 'smem constant byte address 0x4 - core index']
  #allocation1 [shape = 'u32[144,128]{1,0:T(1,128)}', space=vmem, size = 0x12000, scoped, tag = 'internal scratch']
  %s0 = inlined_call_operand.hbm [shape: f32[16,32], index: 0, kind: input, shape index: {}]
  %s1 = inlined_call_operand.hbm [shape: f32[32,128], index: 1, kind: input, shape index: {}]
  %s2 = inlined_call_operand.vmem [shape: f32[1,128], index: 2, kind: input, shape index: {}]
  %s3 = inlined_call_operand.hbm [shape: f32[16,128], index: 3, kind: output, shape index: {}]
  %s4 = sld [smem:[#allocation0]]
  $region30: #{tpu_custom_call.1} parent=0
    _
  %s6 = ssub.s32 1, %s4
  %s7 = scalar_select 0, %s6, %s4
  $region1: #{tpu_custom_call.1} parent=0
    #allocation2 [shape = 'u8[8192]{0}', space=vmem, size = 0x2000, scoped, tag = 'input window, operand 0, single buffered']
    #allocation3 [shape = 's32[1]{0}', space=sflag, size = 0x4, scoped, tag = 'scoped memory for tpu_custom_call.1']
    #allocation4 [shape = 's32[1]{0}', space=sflag, size = 0x4, scoped, tag = 'scoped memory for tpu_custom_call.1']
    #allocation5 [shape = 'u8[16384]{0}', space=vmem, size = 0x4000, scoped, tag = 'input window, operand 1, single buffered']
    #allocation6 [shape = 's32[1]{0}', space=sflag, size = 0x4, scoped, tag = 'scoped memory for tpu_custom_call.1']
    #allocation7 [shape = 'u8[8192]{0}', space=vmem, size = 0x2000, scoped, tag = 'output window, operand 0, single buffered']
    %8 = vsyncpa [#allocation3], 0
    %9 = vsyncpa [#allocation6], 0
    %10 = vsyncpa [#allocation4], 0
    // Predicated region
    $region2: #{tpu_custom_call.1} parent=1 // pred_check
      _
    $region3: #{tpu_custom_call.1} parent=1 // pred_check_branch
      %12 = sbr.rel (0) target = $region5
    $region4: #{tpu_custom_call.1} parent=1 // pred_region
      %s14 = ssub.s32 256, 256
      %15 = vsyncadd [#allocation3], %s14
      %s16 = sshll.u32 [#allocation2], 4
      %s17 = int_to_ptr.vmem [resolvable:$true] %s16
      %22 = dma.hbm_to_vmem [thread:$0]  %s0, 256, %s17, [#allocation3], 128, 128, 8
    $region5: #{tpu_custom_call.1} parent=1 // pred_fallthru
      _
    // Predicated region
    $region6: #{tpu_custom_call.1} parent=1 // pred_check
      _
    $region7: #{tpu_custom_call.1} parent=1 // pred_check_branch
      %24 = sbr.rel (0) target = $region9
    $region8: #{tpu_custom_call.1} parent=1 // pred_region
      %s26 = ssub.s32 512, 512
      %27 = vsyncadd [#allocation6], %s26
      %s28 = sshll.u32 [#allocation5], 4
      %s29 = int_to_ptr.vmem [resolvable:$true] %s28
      %34 = dma.hbm_to_vmem [thread:$0]  %s1, 512, %s29, [#allocation6], 128, 128, 8
    $region9: #{tpu_custom_call.1} parent=1 // pred_fallthru
      _
    // Predicated region
    $region10: #{tpu_custom_call.1} parent=1 // pred_check
      _
    $region11: #{tpu_custom_call.1} parent=1 // pred_check_branch
      %36 = sbr.rel (0) target = $region13
    $region12: #{tpu_custom_call.1} parent=1 // pred_region
      _
    $region13: #{tpu_custom_call.1} parent=1 // pred_fallthru
      _
    // Predicated region
    $region14: #{tpu_custom_call.1} parent=1 // pred_check
      _
    $region15: #{tpu_custom_call.1} parent=1 // pred_check_branch
      %38 = sbr.rel (0) target = $region17
    $region16: #{tpu_custom_call.1} parent=1 // pred_region
      %39 = dma.done [#allocation3], 256
    $region17: #{tpu_custom_call.1} parent=1 // pred_fallthru
      _
    // Predicated region
    $region18: #{tpu_custom_call.1} parent=1 // pred_check
      _
    $region19: #{tpu_custom_call.1} parent=1 // pred_check_branch
      %41 = sbr.rel (0) target = $region21
    $region20: #{tpu_custom_call.1} parent=1 // pred_region
      %42 = dma.done [#allocation6], 512
    $region21: #{tpu_custom_call.1} parent=1 // pred_fallthru
      _
    %v43 = vld [vmem:[#allocation2] sm:$0xff]
    %v44 = vld [vmem:[#allocation2 + $0x8] sm:$0xff]
    %v45 = vld [vmem:[#allocation5] sm:$0xff]
    %v46 = vld [vmem:[#allocation5 + $0x8] sm:$0xff]
    %v47 = vld [vmem:[#allocation5 + $0x10] sm:$0xff]
    %v48 = vld [vmem:[#allocation5 + $0x18] sm:$0xff]
    %v49 = vld [vmem:[%s2] sm:$0x1]
    %v51 = vlaneseq
    %v52 = vshrl.u32 %v51, 7
    %v53 = vsub.s32 0, %v52
    %v54 = vrot.slane %v49, %v53
    %vm56 = vcmask 261120
    %v58 = vsel %vm56, %v43, 0
    %v61 = vsel %vm56, %v44, 0
    %63 = vmatprep.subr.mxu0 0.0
    %64 = vmatpush1.msra.mxu0 %v45
    %65 = vmatprep.subr.mxu0 0.0
    %66 = vmatpush1.msra.mxu0 %v46
    %67 = vmatprep.subr.mxu0 0.0
    %68 = vmatpush1.msra.mxu0 %v47
    %69 = vmatprep.subr.mxu0 0.0
    %70 = vmatpush1.msra.mxu0 %v48
    %71 = vmatprep.subr.mxu0 0.0
    %72 = vmatpush1.msra.mxu0 0.0
    %73 = vmatprep.subr.mxu0 0.0
    %74 = vmatpush1.msra.mxu0 0.0
    %75 = vmatprep.subr.mxu0 0.0
    %76 = vmatpush1.msra.mxu0 0.0
    %77 = vmatprep.subr.mxu0 0.0
    %78 = vmatpush1.msra.mxu0 0.0
    %79 = vmatprep.subr.mxu0 0.0
    %80 = vmatpush1.msra.mxu0 0.0
    %81 = vmatprep.subr.mxu0 0.0
    %82 = vmatpush1.msra.mxu0 0.0
    %83 = vmatprep.subr.mxu0 0.0
    %84 = vmatpush1.msra.mxu0 0.0
    %85 = vmatprep.subr.mxu0 0.0
    %86 = vmatpush1.msra.mxu0 0.0
    %87 = vmatprep.subr.mxu0 0.0
    %88 = vmatpush1.msra.mxu0 0.0
    %89 = vmatprep.subr.mxu0 0.0
    %90 = vmatpush1.msra.mxu0 0.0
    %91 = vmatprep.subr.mxu0 0.0
    %92 = vmatpush1.msra.mxu0 0.0
    %93 = vmatprep.subr.mxu0 0.0
    %94 = vmatpush1.msra.mxu0 0.0
    %95 = vmatprep.subr.mxu0 0.0
    %96 = vmatpush1.msra.mxu0 0.0
    %97 = vmatprep.subr.mxu0 0.0
    %98 = vmatpush1.msra.mxu0 0.0
    %99 = vmatprep.subr.mxu0 0.0
    %100 = vmatpush1.msra.mxu0 0.0
    %101 = vmatprep.subr.mxu0 0.0
    %102 = vmatpush1.msra.mxu0 0.0
    %103 = vmatprep.subr.mxu0 0.0
    %104 = vmatpush1.msra.mxu0 0.0
    %105 = vmatprep.subr.mxu0 0.0
    %106 = vmatpush1.msra.mxu0 0.0
    %107 = vmatprep.subr.mxu0 0.0
    %108 = vmatpush1.msra.mxu0 0.0
    %109 = vmatprep.subr.mxu0 0.0
    %110 = vmatpush1.msra.mxu0 0.0
    %111 = vmatprep.subr.mxu0 0.0
    %112 = vmatpush1.msra.mxu0 0.0
    %113 = vmatprep.subr.mxu0 0.0
    %114 = vmatpush1.msra.mxu0 0.0
    %115 = vmatprep.subr.mxu0 0.0
    %116 = vmatpush1.msra.mxu0 0.0
    %117 = vmatprep.subr.mxu0 0.0
    %118 = vmatpush1.msra.mxu0 0.0
    %119 = vmatprep.subr.mxu0 0.0
    %120 = vmatpush1.msra.mxu0 0.0
    %121 = vmatprep.subr.mxu0 0.0
    %122 = vmatpush1.msra.mxu0 0.0
    %123 = vmatprep.subr.mxu0 0.0
    %124 = vmatpush1.msra.mxu0 0.0
    %125 = vmatprep.subr.mxu0 0.0
    %126 = vmatpush1.msra.mxu0 0.0
    %127 = vmatprep.mubr.f32.mxu0 0.0
    %128 = vmatmul.mubr.f32.gmra.mrb[0].mxu0 %v58
    %v129 = vpop.f32.mrb[0].mxu0
    %v130 = vadd.f32 %v54, %v129
    %v131 = vpop.f32.mrb[0].mxu0
    %132 = vmatprep.mubr.f32.mxu0 0.0
    %133 = vmatmul.mubr.f32.gmra.mrb[0].mxu0 %v61
    %v134 = vpop.f32.mrb[0].mxu0
    %v135 = vadd.f32 %v54, %v134
    %v136 = vpop.f32.mrb[0].mxu0
    %137 = vdwg.mxu0
    %v138 = vmul.f32 %v130, 0.5
    %v139 = vmul.f32 %v135, 0.5
    %v140 = vmul.f32 %v130, 0.70710677
    %v141 = vmul.f32 %v135, 0.70710677
    %v142 = verf.f32.pop %v140
    %v143 = verf.f32.pop %v141
    %v144 = vadd.f32 %v142, 1.0
    %v145 = vadd.f32 %v143, 1.0
    %v146 = vmul.f32 %v138, %v144
    %v147 = vmul.f32 %v139, %v145
    %148 = vst [vmem:[#allocation7] sm:$0xff] %v146
    %149 = vst [vmem:[#allocation7 + $0x8] sm:$0xff] %v147
    // Predicated region
    $region22: #{tpu_custom_call.1} parent=1 // pred_check
      _
    $region23: #{tpu_custom_call.1} parent=1 // pred_check_branch
      %151 = sbr.rel (0) target = $region25
    $region24: #{tpu_custom_call.1} parent=1 // pred_region
      %s153 = ssub.s32 256, 256
      %154 = vsyncadd [#allocation4], %s153
      %s155 = sshll.u32 [#allocation7], 4
      %s156 = int_to_ptr.vmem [resolvable:$true] %s155
      %161 = dma.vmem_to_hbm [thread:$0]  %s156, 256, %s3, [#allocation4], 128, 128, 8
    $region25: #{tpu_custom_call.1} parent=1 // pred_fallthru
      _
    // Predicated region
    $region26: #{tpu_custom_call.1} parent=1 // pred_check
      _
    $region27: #{tpu_custom_call.1} parent=1 // pred_check_branch
      %163 = sbr.rel (0) target = $region29
    $region28: #{tpu_custom_call.1} parent=1 // pred_region
      %164 = dma.done [#allocation4], 256
    $region29: #{tpu_custom_call.1} parent=1 // pred_fallthru
      _
    %165 = vsyncpa [#allocation3], 1
    %166 = vsyncpa [#allocation6], 1
    %167 = vsyncpa [#allocation4], 1

</llo_original>
